<compile_context>
chip_gen: v6e
topology: v6e:2x2x1
jax: 0.10.0
libtpu: 0.0.40
codegen_flags: <defaults>
</compile_context>

<pallas_src>
import functools

import jax
import jax.numpy as jnp
from jax import lax
from jax.experimental import pallas as pl
from jax.experimental.pallas import tpu as pltpu


LEAKY_SLOPE = 0.01   # PyTorch nn.LeakyReLU default negative_slope
LN_EPS = 1e-5        # PyTorch nn.LayerNorm default eps


def _round_up(x, m):
    return (x + m - 1) // m * m


# --------------------------------------------------------------------------- kernels

def _ln_leaky(y, p_ref, d_out):
    """LayerNorm + LeakyReLU epilogue on a (TN, Dp) f32 matmul result.

    Padded lanes of `y` are exactly zero (W and b are zero-padded), so sum(y) and
    sum(y*y) over the padded row already equal the sums over the real D_out columns;
    var = E[y^2] - mean^2 needs no column mask and no extra centered temporaries.
    """
    b = p_ref[0:1, :]
    g = p_ref[1:2, :]
    beta = p_ref[2:3, :]

    y = y + b
    inv_d = jnp.float32(1.0 / d_out)
    mean = jnp.sum(y, axis=-1, keepdims=True) * inv_d
    mean_sq = jnp.sum(y * y, axis=-1, keepdims=True) * inv_d
    var = jnp.maximum(mean_sq - mean * mean, 0.0)      # guard tiny cancellation
    inv_std = lax.rsqrt(var + jnp.float32(LN_EPS))
    y_hat = (y - mean) * inv_std * g + beta
    # LeakyReLU as a single max (one VPU pass fewer than where(y>=0, ...)).
    return jnp.maximum(y_hat, jnp.float32(LEAKY_SLOPE) * y_hat)


def _fe_kernel_masked(x_ref, m_ref, w_ref, p_ref, o_ref, *, d_out, pre_mask):
    if pre_mask:
        # D_in < D_out: masking the (TN, D_in) input is cheaper (and matches x*mask
        # before the Linear, as in the reference module).
        x = x_ref[...] * m_ref[...]
        y = jnp.dot(x, w_ref[...], preferred_element_type=jnp.float32)
    else:
        # D_in >= D_out: fold the row mask post-matmul, m*(x@W) == (m*x)@W.
        y = jnp.dot(x_ref[...], w_ref[...], preferred_element_type=jnp.float32)
        y = y * m_ref[...].astype(jnp.float32)
    o_ref[...] = _ln_leaky(y, p_ref, d_out).astype(o_ref.dtype)


def _fe_kernel_nomask(x_ref, w_ref, p_ref, o_ref, *, d_out):
    y = jnp.dot(x_ref[...], w_ref[...], preferred_element_type=jnp.float32)
    o_ref[...] = _ln_leaky(y, p_ref, d_out).astype(o_ref.dtype)


# ------------------------------------------------------------------------ tiling

def _vmem_budget_bytes():
    """Generation-aware VMEM budget with headroom (v5e/v6e -> ~96-100 MiB, v7x -> ~48 MiB)."""
    try:
        cap = int(pltpu.get_tpu_info().vmem_capacity_bytes)
    except Exception:  # e.g. interpret mode / info unavailable
        cap = 64 << 20
    return int(min(cap * 3 // 4, 100 << 20))


def _choose_tiling(n_rows, d_in_p, dp, itemsize, budget):
    """Pick row-tile TN and padded row count Np."""
    np8 = _round_up(max(n_rows, 1), 8)
    # Per-step VMEM: single-buffered weight + packed param slab (fixed) plus
    # double-buffered x/mask/out tiles and ~4 live (TN, Dp) f32 LN temporaries.
    fixed = d_in_p * dp * itemsize + 8 * dp * 4
    per_row = (2 * d_in_p * itemsize      # x   (double-buffered)
               + 2 * itemsize             # mask (double-buffered)
               + 2 * dp * itemsize        # out (double-buffered)
               + 4 * dp * 4)              # f32 compute temporaries
    tn = 8
    for cand in (1024, 768, 512, 384, 256, 128, 64, 32, 16, 8):
        if fixed + cand * per_row <= budget:
            tn = cand
            break
    # Ensure >= 2 row tiles when there are enough rows (megacore on v7x).
    if np8 > 8:
        tn = min(tn, max(8, (np8 // 2) // 8 * 8))
    tn = min(tn, np8)
    # Bound row-padding waste to ~10% (padded rows do real MXU/HBM work).
    while True:
        npad = _round_up(np8, tn)
        if tn <= 128 or (npad - n_rows) * 10 <= npad:
            break
        tn = max(8, (tn // 2) // 8 * 8)
    return tn, npad


# ------------------------------------------------------------------------ wrapper

def feature_extractor(x, mask, w_t, b, gamma, beta, *, single_buffer_invariants=True):
    """x: (B, S, D_in); mask: (B, S) or None; w_t: (D_in, D_out) (pre-transposed
    Linear weight); b/gamma/beta: (D_out,). Returns (B, S, D_out) in x.dtype."""
    B, S, D_in = x.shape
    D_out = w_t.shape[1]
    N = B * S
    dtype = x.dtype
    itemsize = jnp.dtype(dtype).itemsize

    # Lane-dense layouts: pad both the contraction dim and the feature dim to 128.
    D_in_p = _round_up(D_in, 128)
    Dp = _round_up(D_out, 128)

    budget = _vmem_budget_bytes()
    TN, Np = _choose_tiling(N, D_in_p, Dp, itemsize, budget)
    grid = (Np // TN,)
    pre_mask = D_in_p < Dp

    x2 = x.reshape(N, D_in)
    if Np != N or D_in_p != D_in:
        x2 = jnp.pad(x2, ((0, Np - N), (0, D_in_p - D_in)))

    w_p = w_t.astype(dtype)
    if D_in_p != D_in or Dp != D_out:
        w_p = jnp.pad(w_p, ((0, D_in_p - D_in), (0, Dp - D_out)))

    # b / gamma / beta packed into one (8, Dp) f32 slab (rows 0..2; rest zero).
    params = jnp.zeros((8, Dp), jnp.float32)
    params = params.at[0, :D_out].set(b.astype(jnp.float32))
    params = params.at[1, :D_out].set(gamma.astype(jnp.float32))
    params = params.at[2, :D_out].set(beta.astype(jnp.float32))

    if mask is not None:
        m2 = mask.reshape(N, 1).astype(dtype)
        if Np != N:
            m2 = jnp.pad(m2, ((0, Np - N), (0, 0)))
    else:
        m2 = None

    cost = pl.CostEstimate(
        flops=2 * Np * D_in_p * Dp + 10 * Np * Dp,
        transcendentals=Np,  # one rsqrt per row
        bytes_accessed=(Np * D_in_p * itemsize + D_in_p * Dp * itemsize
                        + 8 * Dp * 4 + Np * Dp * itemsize),
    )
    cparams = pltpu.CompilerParams(
        dimension_semantics=("parallel",),
        vmem_limit_bytes=budget,
    )

    def _run(single_buf):
        inv_kw = {"pipeline_mode": pl.Buffered(1)} if single_buf else {}
        row_spec = pl.BlockSpec((TN, D_in_p), lambda i: (i, 0))
        out_spec = pl.BlockSpec((TN, Dp), lambda i: (i, 0))
        w_spec = pl.BlockSpec((D_in_p, Dp), lambda i: (0, 0), **inv_kw)
        p_spec = pl.BlockSpec((8, Dp), lambda i: (0, 0), **inv_kw)

        if m2 is not None:
            kernel = functools.partial(_fe_kernel_masked, d_out=D_out, pre_mask=pre_mask)
            in_specs = [row_spec, pl.BlockSpec((TN, 1), lambda i: (i, 0)), w_spec, p_spec]
            args = (x2, m2, w_p, params)
        else:
            kernel = functools.partial(_fe_kernel_nomask, d_out=D_out)
            in_specs = [row_spec, w_spec, p_spec]
            args = (x2, w_p, params)

        return pl.pallas_call(
            kernel,
            out_shape=jax.ShapeDtypeStruct((Np, Dp), dtype),
            grid_spec=pltpu.PrefetchScalarGridSpec(
                num_scalar_prefetch=0,
                grid=grid,
                in_specs=in_specs,
                out_specs=out_spec,
            ),
            compiler_params=cparams,
            cost_estimate=cost,
        )(*args)

    try:
        out = _run(single_buffer_invariants)
    except Exception:
        if not single_buffer_invariants:
            raise
        out = _run(False)  # fallback if Buffered(1) is unsupported in this jax version

    if Np != N or Dp != D_out:
        out = out[:N, :D_out]
    return out.reshape(B, S, D_out)


# -------------------------------------------------------------------- init / reference

def init_params(key, input_size, output_size):
    """Mirror PyTorch shapes: Linear.weight (out,in), Linear.bias (out,), LN gamma/beta (out,)."""
    k_w, k_b = jax.random.split(key)
    bound = 1.0 / jnp.sqrt(input_size)
    w = jax.random.uniform(k_w, (output_size, input_size), jnp.float32, -bound, bound)
    b = jax.random.uniform(k_b, (output_size,), jnp.float32, -bound, bound)
    gamma = jnp.ones((output_size,), jnp.float32)
    beta = jnp.zeros((output_size,), jnp.float32)
    return w.T, b, gamma, beta   # pre-transpose weight for x @ W layout


def _reference(x, mask, w_t, b, gamma, beta):
    xr = x if mask is None else x * mask[..., None]
    yr = xr @ w_t + b
    mu = yr.mean(-1, keepdims=True)
    var = ((yr - mu) ** 2).mean(-1, keepdims=True)
    yn = (yr - mu) / jnp.sqrt(var + LN_EPS) * gamma + beta
    return jnp.where(yn >= 0, yn, LEAKY_SLOPE * yn)


if __name__ == "__main__":
    key = jax.random.PRNGKey(0)
    k_x, k_m, k_p = jax.random.split(key, 3)

    B, S, D_in, D_out = 2, 8, 16, 32
    x = jax.random.normal(k_x, (B, S, D_in), jnp.float32)
    mask = (jax.random.uniform(k_m, (B, S)) > 0.3).astype(jnp.float32)  # padding-style mask

    w_t, b, gamma, beta = init_params(k_p, D_in, D_out)

    # masked path
    out_m = jax.block_until_ready(feature_extractor(x, mask, w_t, b, gamma, beta))
    ref_m = _reference(x, mask, w_t, b, gamma, beta)
    assert out_m.shape == (B, S, D_out)
    assert jnp.allclose(out_m, ref_m, atol=2e-3, rtol=2e-3), "mismatch vs reference (masked)"

    # mask=None path (mask input / multiply elided entirely)
    out_n = jax.block_until_ready(feature_extractor(x, None, w_t, b, gamma, beta))
    ref_n = _reference(x, None, w_t, b, gamma, beta)
    assert jnp.allclose(out_n, ref_n, atol=2e-3, rtol=2e-3), "mismatch vs reference (no mask)"

    print("KERNEL_OK")
</pallas_src>

<mosaic_0001>
module attributes {stable_mosaic.version = 11 : i64} {
  func.func @_fe_kernel_masked(%arg0: i32, %arg1: memref<8x128xf32, #tpu.memory_space<vmem>>, %arg2: memref<8x1xf32, #tpu.memory_space<vmem>>, %arg3: memref<128x128xf32, #tpu.memory_space<vmem>>, %arg4: memref<8x128xf32, #tpu.memory_space<vmem>>, %arg5: memref<8x128xf32, #tpu.memory_space<vmem>>) attributes {dimension_semantics = [#tpu.dimension_semantics<parallel>], iteration_bounds = array<i64: 2>, scalar_prefetch = 0 : i64, scratch_operands = 0 : i64, tpu.core_type = #tpu.core_type<tc>, window_params = [{transform_indices = @transform_0, window_bounds = array<i64: 8, 128>}, {transform_indices = @transform_1, window_bounds = array<i64: 8, 1>}, {pipeline_mode = #tpu.pipeline_mode<synchronous>, transform_indices = @transform_2, window_bounds = array<i64: 128, 128>}, {pipeline_mode = #tpu.pipeline_mode<synchronous>, transform_indices = @transform_3, window_bounds = array<i64: 8, 128>}, {transform_indices = @transform_4, window_bounds = array<i64: 8, 128>}]} {
    %c0 = arith.constant 0 : index
    %c0_0 = arith.constant 0 : index
    %0 = vector.load %arg1[%c0, %c0_0] : memref<8x128xf32, #tpu.memory_space<vmem>>, vector<8x128xf32>
    %c0_1 = arith.constant 0 : index
    %c0_2 = arith.constant 0 : index
    %1 = vector.load %arg3[%c0_1, %c0_2] : memref<128x128xf32, #tpu.memory_space<vmem>>, vector<128x128xf32>
    %cst = arith.constant dense<0.000000e+00> : vector<8x128xf32>
    %2 = tpu.matmul %0, %1, %cst {dimension_numbers = #tpu.dot_dimension_numbers<[1], [0], [0], [1], [0, 0, 1, 1], [], []>} : vector<8x128xf32>, vector<128x128xf32>, vector<8x128xf32> -> vector<8x128xf32>
    %c0_3 = arith.constant 0 : index
    %c0_4 = arith.constant 0 : index
    %3 = vector.load %arg2[%c0_3, %c0_4] : memref<8x1xf32, #tpu.memory_space<vmem>>, vector<8x1xf32>
    %4 = vector.broadcast %3 : vector<8x1xf32> to vector<8x128xf32>
    %5 = arith.mulf %2, %4 : vector<8x128xf32>
    %c0_5 = arith.constant 0 : index
    %c0_6 = arith.constant 0 : index
    %6 = vector.load %arg4[%c0_5, %c0_6] : memref<8x128xf32, #tpu.memory_space<vmem>>, vector<1x128xf32>
    %c1 = arith.constant 1 : index
    %c0_7 = arith.constant 0 : index
    %7 = vector.load %arg4[%c1, %c0_7] : memref<8x128xf32, #tpu.memory_space<vmem>>, vector<1x128xf32>
    %c2 = arith.constant 2 : index
    %c0_8 = arith.constant 0 : index
    %8 = vector.load %arg4[%c2, %c0_8] : memref<8x128xf32, #tpu.memory_space<vmem>>, vector<1x128xf32>
    %9 = vector.broadcast %6 : vector<1x128xf32> to vector<8x128xf32>
    %10 = arith.addf %5, %9 : vector<8x128xf32>
    %cst_9 = arith.constant dense<0.000000e+00> : vector<8xf32>
    %11 = vector.multi_reduction <add>, %10, %cst_9 [1] : vector<8x128xf32> to vector<8xf32>
    %12 = vector.shape_cast %11 : vector<8xf32> to vector<8x1xf32>
    %cst_10 = arith.constant 3.125000e-02 : f32
    %13 = vector.broadcast %cst_10 : f32 to vector<8x1xf32>
    %14 = arith.mulf %12, %13 : vector<8x1xf32>
    %15 = arith.mulf %10, %10 : vector<8x128xf32>
    %cst_11 = arith.constant dense<0.000000e+00> : vector<8xf32>
    %16 = vector.multi_reduction <add>, %15, %cst_11 [1] : vector<8x128xf32> to vector<8xf32>
    %17 = vector.shape_cast %16 : vector<8xf32> to vector<8x1xf32>
    %cst_12 = arith.constant 3.125000e-02 : f32
    %18 = vector.broadcast %cst_12 : f32 to vector<8x1xf32>
    %19 = arith.mulf %17, %18 : vector<8x1xf32>
    %20 = arith.mulf %14, %14 : vector<8x1xf32>
    %21 = arith.subf %19, %20 : vector<8x1xf32>
    %cst_13 = arith.constant 0.000000e+00 : f32
    %22 = vector.broadcast %cst_13 : f32 to vector<8x1xf32>
    %23 = arith.maximumf %21, %22 : vector<8x1xf32>
    %cst_14 = arith.constant 9.99999974E-6 : f32
    %24 = vector.broadcast %cst_14 : f32 to vector<8x1xf32>
    %25 = arith.addf %23, %24 : vector<8x1xf32>
    %26 = math.rsqrt %25 : vector<8x1xf32>
    %27 = vector.broadcast %14 : vector<8x1xf32> to vector<8x128xf32>
    %28 = arith.subf %10, %27 : vector<8x128xf32>
    %29 = vector.broadcast %26 : vector<8x1xf32> to vector<8x128xf32>
    %30 = arith.mulf %28, %29 : vector<8x128xf32>
    %31 = vector.broadcast %7 : vector<1x128xf32> to vector<8x128xf32>
    %32 = arith.mulf %30, %31 : vector<8x128xf32>
    %33 = vector.broadcast %8 : vector<1x128xf32> to vector<8x128xf32>
    %34 = arith.addf %32, %33 : vector<8x128xf32>
    %cst_15 = arith.constant 0.00999999977 : f32
    %35 = vector.broadcast %cst_15 : f32 to vector<8x128xf32>
    %36 = arith.mulf %35, %34 : vector<8x128xf32>
    %37 = arith.maximumf %34, %36 : vector<8x128xf32>
    %c0_16 = arith.constant 0 : index
    %c0_17 = arith.constant 0 : index
    %38 = vector.load %arg5[%c0_16, %c0_17] : memref<8x128xf32, #tpu.memory_space<vmem>>, vector<8x128xf32>
    tpu.vector_store %arg5[%c0_16, %c0_17], %37 {strides = array<i32>} : memref<8x128xf32, #tpu.memory_space<vmem>>, vector<8x128xf32>,
    return
  }
  func.func @transform_0(%arg0: i32) -> (i32, i32) {
    %c0_i32 = arith.constant 0 : i32
    %c0_i32_0 = arith.constant 0 : i32
    return %arg0, %c0_i32 : i32, i32
  }
  func.func @transform_1(%arg0: i32) -> (i32, i32) {
    %c0_i32 = arith.constant 0 : i32
    %c0_i32_0 = arith.constant 0 : i32
    return %arg0, %c0_i32 : i32, i32
  }
  func.func @transform_2(%arg0: i32) -> (i32, i32) {
    %c0_i32 = arith.constant 0 : i32
    %c0_i32_0 = arith.constant 0 : i32
    %c0_i32_1 = arith.constant 0 : i32
    return %c0_i32, %c0_i32_0 : i32, i32
  }
  func.func @transform_3(%arg0: i32) -> (i32, i32) {
    %c0_i32 = arith.constant 0 : i32
    %c0_i32_0 = arith.constant 0 : i32
    %c0_i32_1 = arith.constant 0 : i32
    return %c0_i32, %c0_i32_0 : i32, i32
  }
  func.func @transform_4(%arg0: i32) -> (i32, i32) {
    %c0_i32 = arith.constant 0 : i32
    %c0_i32_0 = arith.constant 0 : i32
    return %arg0, %c0_i32 : i32, i32
  }
}

module attributes {stable_mosaic.version = 11 : i64} {
  func.func @_fe_kernel_masked(%arg0: i32, %arg1: memref<8x128xf32, #tpu.memory_space<vmem>>, %arg2: memref<8x1xf32, #tpu.memory_space<vmem>>, %arg3: memref<128x128xf32, #tpu.memory_space<vmem>>, %arg4: memref<8x128xf32, #tpu.memory_space<vmem>>, %arg5: memref<8x128xf32, #tpu.memory_space<vmem>>) attributes {dimension_semantics = [#tpu.dimension_semantics<parallel>], iteration_bounds = array<i64: 2>, scalar_prefetch = 0 : i64, scratch_operands = 0 : i64, tpu.core_type = #tpu.core_type<tc>, window_params = [{transform_indices = @transform_0, window_bounds = array<i64: 8, 128>}, {transform_indices = @transform_1, window_bounds = array<i64: 8, 1>}, {pipeline_mode = #tpu.pipeline_mode<synchronous>, transform_indices = @transform_2, window_bounds = array<i64: 128, 128>}, {pipeline_mode = #tpu.pipeline_mode<synchronous>, transform_indices = @transform_3, window_bounds = array<i64: 8, 128>}, {transform_indices = @transform_4, window_bounds = array<i64: 8, 128>}]} {
    %c0 = arith.constant 0 : index
    %c0_0 = arith.constant 0 : index
    %0 = vector.load %arg1[%c0, %c0_0] : memref<8x128xf32, #tpu.memory_space<vmem>>, vector<8x128xf32>
    %c0_1 = arith.constant 0 : index
    %c0_2 = arith.constant 0 : index
    %1 = vector.load %arg3[%c0_1, %c0_2] : memref<128x128xf32, #tpu.memory_space<vmem>>, vector<128x128xf32>
    %cst = arith.constant dense<0.000000e+00> : vector<8x128xf32>
    %2 = tpu.matmul %0, %1, %cst {dimension_numbers = #tpu.dot_dimension_numbers<[1], [0], [0], [1], [0, 0, 1, 1], [], []>} : vector<8x128xf32>, vector<128x128xf32>, vector<8x128xf32> -> vector<8x128xf32>
    %c0_3 = arith.constant 0 : index
    %c0_4 = arith.constant 0 : index
    %3 = vector.load %arg2[%c0_3, %c0_4] : memref<8x1xf32, #tpu.memory_space<vmem>>, vector<8x1xf32>
    %4 = vector.broadcast %3 : vector<8x1xf32> to vector<8x128xf32>
    %5 = arith.mulf %2, %4 : vector<8x128xf32>
    %c0_5 = arith.constant 0 : index
    %c0_6 = arith.constant 0 : index
    %6 = vector.load %arg4[%c0_5, %c0_6] : memref<8x128xf32, #tpu.memory_space<vmem>>, vector<1x128xf32>
    %c1 = arith.constant 1 : index
    %c0_7 = arith.constant 0 : index
    %7 = vector.load %arg4[%c1, %c0_7] : memref<8x128xf32, #tpu.memory_space<vmem>>, vector<1x128xf32>
    %c2 = arith.constant 2 : index
    %c0_8 = arith.constant 0 : index
    %8 = vector.load %arg4[%c2, %c0_8] : memref<8x128xf32, #tpu.memory_space<vmem>>, vector<1x128xf32>
    %9 = vector.broadcast %6 : vector<1x128xf32> to vector<8x128xf32>
    %10 = arith.addf %5, %9 : vector<8x128xf32>
    %cst_9 = arith.constant dense<0.000000e+00> : vector<8xf32>
    %11 = vector.multi_reduction <add>, %10, %cst_9 [1] : vector<8x128xf32> to vector<8xf32>
    %12 = vector.shape_cast %11 : vector<8xf32> to vector<8x1xf32>
    %cst_10 = arith.constant 3.125000e-02 : f32
    %13 = vector.broadcast %cst_10 : f32 to vector<8x1xf32>
    %14 = arith.mulf %12, %13 : vector<8x1xf32>
    %15 = arith.mulf %10, %10 : vector<8x128xf32>
    %cst_11 = arith.constant dense<0.000000e+00> : vector<8xf32>
    %16 = vector.multi_reduction <add>, %15, %cst_11 [1] : vector<8x128xf32> to vector<8xf32>
    %17 = vector.shape_cast %16 : vector<8xf32> to vector<8x1xf32>
    %cst_12 = arith.constant 3.125000e-02 : f32
    %18 = vector.broadcast %cst_12 : f32 to vector<8x1xf32>
    %19 = arith.mulf %17, %18 : vector<8x1xf32>
    %20 = arith.mulf %14, %14 : vector<8x1xf32>
    %21 = arith.subf %19, %20 : vector<8x1xf32>
    %cst_13 = arith.constant 0.000000e+00 : f32
    %22 = vector.broadcast %cst_13 : f32 to vector<8x1xf32>
    %23 = arith.maximumf %21, %22 : vector<8x1xf32>
    %cst_14 = arith.constant 9.99999974E-6 : f32
    %24 = vector.broadcast %cst_14 : f32 to vector<8x1xf32>
    %25 = arith.addf %23, %24 : vector<8x1xf32>
    %26 = math.rsqrt %25 : vector<8x1xf32>
    %27 = vector.broadcast %14 : vector<8x1xf32> to vector<8x128xf32>
    %28 = arith.subf %10, %27 : vector<8x128xf32>
    %29 = vector.broadcast %26 : vector<8x1xf32> to vector<8x128xf32>
    %30 = arith.mulf %28, %29 : vector<8x128xf32>
    %31 = vector.broadcast %7 : vector<1x128xf32> to vector<8x128xf32>
    %32 = arith.mulf %30, %31 : vector<8x128xf32>
    %33 = vector.broadcast %8 : vector<1x128xf32> to vector<8x128xf32>
    %34 = arith.addf %32, %33 : vector<8x128xf32>
    %cst_15 = arith.constant 0.00999999977 : f32
    %35 = vector.broadcast %cst_15 : f32 to vector<8x128xf32>
    %36 = arith.mulf %35, %34 : vector<8x128xf32>
    %37 = arith.maximumf %34, %36 : vector<8x128xf32>
    %c0_16 = arith.constant 0 : index
    %c0_17 = arith.constant 0 : index
    %38 = vector.load %arg5[%c0_16, %c0_17] : memref<8x128xf32, #tpu.memory_space<vmem>>, vector<8x128xf32>
    tpu.vector_store %arg5[%c0_16, %c0_17], %37 {strides = array<i32>} : memref<8x128xf32, #tpu.memory_space<vmem>>, vector<8x128xf32>,
    return
  }
  func.func @transform_0(%arg0: i32) -> (i32, i32) {
    %c0_i32 = arith.constant 0 : i32
    %c0_i32_0 = arith.constant 0 : i32
    return %arg0, %c0_i32 : i32, i32
  }
  func.func @transform_1(%arg0: i32) -> (i32, i32) {
    %c0_i32 = arith.constant 0 : i32
    %c0_i32_0 = arith.constant 0 : i32
    return %arg0, %c0_i32 : i32, i32
  }
  func.func @transform_2(%arg0: i32) -> (i32, i32) {
    %c0_i32 = arith.constant 0 : i32
    %c0_i32_0 = arith.constant 0 : i32
    %c0_i32_1 = arith.constant 0 : i32
    return %c0_i32, %c0_i32_0 : i32, i32
  }
  func.func @transform_3(%arg0: i32) -> (i32, i32) {
    %c0_i32 = arith.constant 0 : i32
    %c0_i32_0 = arith.constant 0 : i32
    %c0_i32_1 = arith.constant 0 : i32
    return %c0_i32, %c0_i32_0 : i32, i32
  }
  func.func @transform_4(%arg0: i32) -> (i32, i32) {
    %c0_i32 = arith.constant 0 : i32
    %c0_i32_0 = arith.constant 0 : i32
    return %arg0, %c0_i32 : i32, i32
  }
}

</mosaic_0001>

<llo_original>
// kernel: tpu_custom_call.1
$region0: #{tpu_custom_call.1}
  #allocation0 [shape = 'u32[]', space=smem, size = 0x4, offset = 0x4, fixed_abs, tag = 'smem constant byte address 0x4 - core index']
  #allocation1 [shape = 'u32[144,128]{1,0:T(1,128)}', space=vmem, size = 0x12000, scoped, tag = 'internal scratch']
  %s0 = inlined_call_operand.vmem [shape: f32[16,128], index: 0, kind: input, shape index: {}]
  %s1 = inlined_call_operand.vmem [shape: f32[16,1], index: 1, kind: input, shape index: {}]
  %s2 = inlined_call_operand.hbm [shape: f32[128,128], index: 2, kind: input, shape index: {}]
  %s3 = inlined_call_operand.hbm [shape: f32[8,128], index: 3, kind: input, shape index: {}]
  %s4 = inlined_call_operand.hbm [shape: f32[16,128], index: 4, kind: output, shape index: {}]
  %s5 = sld [smem:[#allocation0]]
  $region57: #{tpu_custom_call.1} parent=0
    _
  %s7 = ssub.s32 1, %s5
  %s8 = scalar_select 0, %s7, %s5
  $region1: #{tpu_custom_call.1} parent=0
    #allocation2 [shape = 'u8[65536]{0}', space=vmem, size = 0x10000, scoped, tag = 'input window, operand 2, single buffered']
    #allocation3 [shape = 's32[2]{0}', space=sflag, size = 0x8, scoped, tag = 'scoped memory for tpu_custom_call.1']
    #allocation4 [shape = 's32[2]{0}', space=sflag, size = 0x8, scoped, tag = 'scoped memory for tpu_custom_call.1']
    #allocation5 [shape = 'u8[4096]{0}', space=vmem, size = 0x1000, scoped, tag = 'input window, operand 3, single buffered']
    #allocation6 [shape = 's32[1]{0}', space=sflag, size = 0x4, scoped, tag = 'scoped memory for tpu_custom_call.1']
    #allocation7 [shape = 'u8[8192]{0}', space=vmem, size = 0x2000, scoped, tag = 'output window, operand 0']
    %9 = vsyncpa [#allocation3], 0
    %10 = vsyncpa [#allocation6], 0
    %11 = vsyncpa [#allocation4], 0
    %s12 = scalar_lea.sflag [#allocation4], 1
    %13 = vsyncpa %s12, 0
    loop: start=0, step=1, limit=4
    $region2: #{tpu_custom_call.1} parent=1 // loop_pre_header
      _
    $region3: #{tpu_custom_call.1} parent=1 // loop_header
      %s15 = sphi 0, %s19
      %p16 = scmp.ge.s32.totalorder %s15, 4
      %s25 = sphi 0, %s27
      %s28 = sphi 0, %s25
      %s29 = sphi 0, %s28
      %s45 = sphi 0, %s29
      %s51 = sphi 0, %s53
      %s54 = sphi 0, %s51
      %s55 = sphi 0, %s54
      %s71 = sphi 0, %s55
      %s75 = sphi 0, %s75
      %s77 = sphi 0, %s75
      %s78 = sphi 0, %s77
      %s92 = sphi 0, %s78
      %s96 = sphi 0, %s96
      %s98 = sphi 0, %s96
      %s99 = sphi 0, %s98
      %s113 = sphi 0, %s99
      %s119 = sphi 0, %s121
      %s122 = sphi 0, %s119
      %s123 = sphi 0, %s122
      %s139 = sphi 0, %s123
    $region4: #{tpu_custom_call.1} parent=1 // loop_header_branch
      %18 = sbr.rel (%p16) target = $region8
    $region5: #{tpu_custom_call.1} parent=1 // loop_body
      %s20 = ssub.s32 %s15, 1
      %s21 = ssub.s32 %s15, 2
      %s22 = sadd.s32 %s15, 1
      %s23 = ssub.s32 %s15, %s22
      %p24 = scmp.eq.s32.totalorder %s23, 0
      %s26 = sadd.s32 %s25, 1
      %s27 = scalar_select %p24, %s25, %s26
      %p30 = pneg %p24
      %p31 = scmp.eq.s32.totalorder %s15, 1
      %p32 = por %p30, %p31
      %p33 = scmp.ne.s32.totalorder %s25, %s28
      %p34 = scmp.eq.s32.totalorder %s15, 0
      %p35 = por %p33, %p34
      %p36 = scmp.ne.s32.totalorder %s25, %s28
      %p37 = scmp.eq.s32.totalorder %s20, 1
      %p38 = por %p36, %p37
      %p39 = scmp.ne.s32.totalorder %s28, %s29
      %p40 = scmp.eq.s32.totalorder %s20, 0
      %p41 = por %p39, %p40
      %p42 = scmp.ne.s32.totalorder %s28, %s29
      %p43 = scmp.eq.s32.totalorder %s21, 1
      %p44 = por %p42, %p43
      %p46 = scmp.ne.s32.totalorder %s29, %s45
      %p47 = scmp.eq.s32.totalorder %s21, 0
      %p48 = por %p46, %p47
      %s49 = ssub.s32 %s15, %s22
      %p50 = scmp.eq.s32.totalorder %s49, 0
      %s52 = sadd.s32 %s51, 1
      %s53 = scalar_select %p50, %s51, %s52
      %p56 = pneg %p50
      %p57 = scmp.eq.s32.totalorder %s15, 1
      %p58 = por %p56, %p57
      %p59 = scmp.ne.s32.totalorder %s51, %s54
      %p60 = scmp.eq.s32.totalorder %s15, 0
      %p61 = por %p59, %p60
      %p62 = scmp.ne.s32.totalorder %s51, %s54
      %p63 = scmp.eq.s32.totalorder %s20, 1
      %p64 = por %p62, %p63
      %p65 = scmp.ne.s32.totalorder %s54, %s55
      %p66 = scmp.eq.s32.totalorder %s20, 0
      %p67 = por %p65, %p66
      %p68 = scmp.ne.s32.totalorder %s54, %s55
      %p69 = scmp.eq.s32.totalorder %s21, 1
      %p70 = por %p68, %p69
      %p72 = scmp.ne.s32.totalorder %s55, %s71
      %p73 = scmp.eq.s32.totalorder %s21, 0
      %p74 = por %p72, %p73
      %s76 = sadd.s32 %s75, 1
      %p79 = scmp.eq.s32.totalorder %s15, 1
      %p80 = scmp.ne.s32.totalorder %s75, %s77
      %p81 = scmp.eq.s32.totalorder %s15, 0
      %p82 = por %p80, %p81
      %p83 = scmp.ne.s32.totalorder %s75, %s77
      %p84 = scmp.eq.s32.totalorder %s20, 1
      %p85 = por %p83, %p84
      %p86 = scmp.ne.s32.totalorder %s77, %s78
      %p87 = scmp.eq.s32.totalorder %s20, 0
      %p88 = por %p86, %p87
      %p89 = scmp.ne.s32.totalorder %s77, %s78
      %p90 = scmp.eq.s32.totalorder %s21, 1
      %p91 = por %p89, %p90
      %p93 = scmp.ne.s32.totalorder %s78, %s92
      %p94 = scmp.eq.s32.totalorder %s21, 0
      %p95 = por %p93, %p94
      %s97 = sadd.s32 %s96, 1
      %p100 = scmp.eq.s32.totalorder %s15, 1
      %p101 = scmp.ne.s32.totalorder %s96, %s98
      %p102 = scmp.eq.s32.totalorder %s15, 0
      %p103 = por %p101, %p102
      %p104 = scmp.ne.s32.totalorder %s96, %s98
      %p105 = scmp.eq.s32.totalorder %s20, 1
      %p106 = por %p104, %p105
      %p107 = scmp.ne.s32.totalorder %s98, %s99
      %p108 = scmp.eq.s32.totalorder %s20, 0
      %p109 = por %p107, %p108
      %p110 = scmp.ne.s32.totalorder %s98, %s99
      %p111 = scmp.eq.s32.totalorder %s21, 1
      %p112 = por %p110, %p111
      %p114 = scmp.ne.s32.totalorder %s99, %s113
      %p115 = scmp.eq.s32.totalorder %s21, 0
      %p116 = por %p114, %p115
      %s117 = ssub.s32 %s15, %s22
      %p118 = scmp.eq.s32.totalorder %s117, 0
      %s120 = sadd.s32 %s119, 1
      %s121 = scalar_select %p118, %s119, %s120
      %p124 = pneg %p118
      %p125 = scmp.eq.s32.totalorder %s15, 1
      %p126 = por %p124, %p125
      %p127 = scmp.ne.s32.totalorder %s119, %s122
      %p128 = scmp.eq.s32.totalorder %s15, 0
      %p129 = por %p127, %p128
      %p130 = scmp.ne.s32.totalorder %s119, %s122
      %p131 = scmp.eq.s32.totalorder %s20, 1
      %p132 = por %p130, %p131
      %p133 = scmp.ne.s32.totalorder %s122, %s123
      %p134 = scmp.eq.s32.totalorder %s20, 0
      %p135 = por %p133, %p134
      %p136 = scmp.ne.s32.totalorder %s122, %s123
      %p137 = scmp.eq.s32.totalorder %s21, 1
      %p138 = por %p136, %p137
      %p140 = scmp.ne.s32.totalorder %s123, %s139
      %p141 = scmp.eq.s32.totalorder %s21, 0
      %p142 = por %p140, %p141
      %p143 = scmp.le.s32.totalorder 1, %s15
      %p144 = scmp.lt.s32.totalorder %s15, 3
      %p145 = pnand %p143, %p144
      %p146 = pneg %p145
      // Predicated region
      $region9: #{tpu_custom_call.1} parent=5 // pred_check
        _
      $region10: #{tpu_custom_call.1} parent=5 // pred_check_branch
        %148 = sbr.rel (%p145) target = $region12
      $region11: #{tpu_custom_call.1} parent=5 // pred_region
        %s149 = ssub.s32 %s15, 1
        // Predicated region
        $region13: #{tpu_custom_call.1} parent=11 // pred_check
          %p150 = pneg %p88
        $region14: #{tpu_custom_call.1} parent=11 // pred_check_branch
          %152 = sbr.rel (%p150) target = $region16
        $region15: #{tpu_custom_call.1} parent=11 // pred_region
          %s154 = ssub.s32 2048, 2048
          %155 = vsyncadd [#allocation3], %s154
          %s156 = sshll.u32 [#allocation2], 4
          %s157 = int_to_ptr.vmem [resolvable:$true] %s156
          %162 = dma.hbm_to_vmem [thread:$0]  %s2, 2048, %s157, [#allocation3], 128, 128, 8
        $region16: #{tpu_custom_call.1} parent=11 // pred_fallthru
          _
        // Predicated region
        $region17: #{tpu_custom_call.1} parent=11 // pred_check
          %p163 = pneg %p109
        $region18: #{tpu_custom_call.1} parent=11 // pred_check_branch
          %165 = sbr.rel (%p163) target = $region20
        $region19: #{tpu_custom_call.1} parent=11 // pred_region
          %s167 = ssub.s32 128, 128
          %168 = vsyncadd [#allocation6], %s167
          %s170 = sshll.u32 [#allocation5], 4
          %s171 = int_to_ptr.vmem [resolvable:$true] %s170
          %173 = dma.hbm_to_vmem [thread:$0]  %s3, 128, %s171, [#allocation6]
        $region20: #{tpu_custom_call.1} parent=11 // pred_fallthru
          _
      $region12: #{tpu_custom_call.1} parent=5 // pred_fallthru
        _
      %p174 = scmp.lt.s32.totalorder %s15, 2
      // Predicated region
      $region21: #{tpu_custom_call.1} parent=5 // pred_check
        %p175 = pneg %p174
      $region22: #{tpu_custom_call.1} parent=5 // pred_check_branch
        %177 = sbr.rel (%p175) target = $region24
      $region23: #{tpu_custom_call.1} parent=5 // pred_region
        // Predicated region
        $region25: #{tpu_custom_call.1} parent=23 // pred_check
          %p178 = pneg %p35
        $region26: #{tpu_custom_call.1} parent=23 // pred_check_branch
          %180 = sbr.rel (%p178) target = $region28
        $region27: #{tpu_custom_call.1} parent=23 // pred_region
          %p181 = scmp.lt.s32.totalorder %s15, 1
          %s182 = scalar_select %p181, %s15, 1
          %s183 = smul.addr %s182, 8
          %s184 = scalar_lea.vmem %s0, %s183
        $region28: #{tpu_custom_call.1} parent=23 // pred_fallthru
          _
        // Predicated region
        $region29: #{tpu_custom_call.1} parent=23 // pred_check
          %p185 = pneg %p61
        $region30: #{tpu_custom_call.1} parent=23 // pred_check_branch
          %187 = sbr.rel (%p185) target = $region32
        $region31: #{tpu_custom_call.1} parent=23 // pred_region
          %p188 = scmp.lt.s32.totalorder %s15, 1
          %s189 = scalar_select %p188, %s15, 1
          %s190 = smul.addr %s189, 8
          %s191 = scalar_lea.vmem %s1, %s190
        $region32: #{tpu_custom_call.1} parent=23 // pred_fallthru
          _
      $region24: #{tpu_custom_call.1} parent=5 // pred_fallthru
        _
      %p192 = scmp.le.s32.totalorder 1, %s15
      %p193 = scmp.lt.s32.totalorder %s15, 3
      %p194 = pnand %p192, %p193
      %p195 = pneg %p194
      // Predicated region
      $region33: #{tpu_custom_call.1} parent=5 // pred_check
        _
      $region34: #{tpu_custom_call.1} parent=5 // pred_check_branch
        %197 = sbr.rel (%p194) target = $region36
      $region35: #{tpu_custom_call.1} parent=5 // pred_region
        %s198 = ssub.s32 %s15, 1
        // Predicated region
        $region37: #{tpu_custom_call.1} parent=35 // pred_check
          %p199 = pneg %p88
        $region38: #{tpu_custom_call.1} parent=35 // pred_check_branch
          %201 = sbr.rel (%p199) target = $region40
        $region39: #{tpu_custom_call.1} parent=35 // pred_region
          %202 = dma.done [#allocation3], 2048
        $region40: #{tpu_custom_call.1} parent=35 // pred_fallthru
          _
        // Predicated region
        $region41: #{tpu_custom_call.1} parent=35 // pred_check
          %p203 = pneg %p109
        $region42: #{tpu_custom_call.1} parent=35 // pred_check_branch
          %205 = sbr.rel (%p203) target = $region44
        $region43: #{tpu_custom_call.1} parent=35 // pred_region
          %206 = dma.done [#allocation6], 128
        $region44: #{tpu_custom_call.1} parent=35 // pred_fallthru
          _
        %p207 = scmp.lt.s32.totalorder %s20, 1
        %s208 = scalar_select %p207, %s20, 1
        %s209 = smul.addr %s208, 8
        %s210 = scalar_lea.vmem %s0, %s209
        %p211 = pneg %p41
        %p212 = pneg %p38
        %p213 = scmp.lt.s32.totalorder %s20, 1
        %s214 = scalar_select %p213, %s20, 1
        %s215 = smul.addr %s214, 8
        %s216 = scalar_lea.vmem %s1, %s215
        %p217 = pneg %p67
        %p218 = pneg %p64
        %p219 = pneg %p88
        %p220 = pneg %p85
        %p221 = pneg %p109
        %p222 = pneg %p106
        %p223 = pneg %p135
        %p224 = pneg %p132
        %s225 = sand.u32 %s122, 1
        %s226 = scalar_lea.sflag [#allocation4], %s225
        %s227 = sand.u32 %s122, 1
        %s228 = smul.addr %s227, 8
        %s229 = scalar_lea.vmem [#allocation7], %s228
        %p230 = scmp.lt.s32.totalorder %s20, 1
        %s231 = scalar_select %p230, %s20, 1
        %s232 = smul.addr %s231, 8
        %s233 = scalar_lea.vmem %s0, %s232
        %p234 = scmp.lt.s32.totalorder %s20, 1
        %s235 = scalar_select %p234, %s20, 1
        %s236 = smul.addr %s235, 8
        %s237 = scalar_lea.vmem %s1, %s236
        %v238 = vld [vmem:[%s233] sm:$0xff]
        %v239 = vld [vmem:[#allocation2] sm:$0xff]
        %v240 = vld [vmem:[#allocation2 + $0x8] sm:$0xff]
        %v241 = vld [vmem:[#allocation2 + $0x10] sm:$0xff]
        %v242 = vld [vmem:[#allocation2 + $0x18] sm:$0xff]
        %v243 = vld [vmem:[#allocation2 + $0x20] sm:$0xff]
        %v244 = vld [vmem:[#allocation2 + $0x28] sm:$0xff]
        %v245 = vld [vmem:[#allocation2 + $0x30] sm:$0xff]
        %v246 = vld [vmem:[#allocation2 + $0x38] sm:$0xff]
        %v247 = vld [vmem:[#allocation2 + $0x40] sm:$0xff]
        %v248 = vld [vmem:[#allocation2 + $0x48] sm:$0xff]
        %v249 = vld [vmem:[#allocation2 + $0x50] sm:$0xff]
        %v250 = vld [vmem:[#allocation2 + $0x58] sm:$0xff]
        %v251 = vld [vmem:[#allocation2 + $0x60] sm:$0xff]
        %v252 = vld [vmem:[#allocation2 + $0x68] sm:$0xff]
        %v253 = vld [vmem:[#allocation2 + $0x70] sm:$0xff]
        %v254 = vld [vmem:[#allocation2 + $0x78] sm:$0xff]
        %255 = vmatprep.subr.mxu0 0.0
        %256 = vmatpush1.msra.mxu0 %v254
        %257 = vmatprep.subr.mxu0 0.0
        %258 = vmatpush1.msra.mxu0 %v253
        %259 = vmatprep.subr.mxu0 0.0
        %260 = vmatpush1.msra.mxu0 %v252
        %261 = vmatprep.subr.mxu0 0.0
        %262 = vmatpush1.msra.mxu0 %v251
        %263 = vmatprep.subr.mxu0 0.0
        %264 = vmatpush1.msra.mxu0 %v250
        %265 = vmatprep.subr.mxu0 0.0
        %266 = vmatpush1.msra.mxu0 %v249
        %267 = vmatprep.subr.mxu0 0.0
        %268 = vmatpush1.msra.mxu0 %v248
        %269 = vmatprep.subr.mxu0 0.0
        %270 = vmatpush1.msra.mxu0 %v247
        %271 = vmatprep.subr.mxu0 0.0
        %272 = vmatpush1.msra.mxu0 %v246
        %273 = vmatprep.subr.mxu0 0.0
        %274 = vmatpush1.msra.mxu0 %v245
        %275 = vmatprep.subr.mxu0 0.0
        %276 = vmatpush1.msra.mxu0 %v244
        %277 = vmatprep.subr.mxu0 0.0
        %278 = vmatpush1.msra.mxu0 %v243
        %279 = vmatprep.subr.mxu0 0.0
        %280 = vmatpush1.msra.mxu0 %v242
        %281 = vmatprep.subr.mxu0 0.0
        %282 = vmatpush1.msra.mxu0 %v241
        %283 = vmatprep.subr.mxu0 0.0
        %284 = vmatpush1.msra.mxu0 %v240
        %285 = vmatprep.subr.mxu0 0.0
        %286 = vmatpush1.msra.mxu0 %v239
        %287 = vmatprep.subr.mxu0 0.0
        %288 = vmatpush2.msra.mxu0 0.0
        %289 = vmatprep.subr.mxu0 0.0
        %290 = vmatpush2.msra.mxu0 0.0
        %291 = vmatprep.subr.mxu0 0.0
        %292 = vmatpush2.msra.mxu0 0.0
        %293 = vmatprep.subr.mxu0 0.0
        %294 = vmatpush2.msra.mxu0 0.0
        %295 = vmatprep.subr.mxu0 0.0
        %296 = vmatpush2.msra.mxu0 0.0
        %297 = vmatprep.subr.mxu0 0.0
        %298 = vmatpush2.msra.mxu0 0.0
        %299 = vmatprep.subr.mxu0 0.0
        %300 = vmatpush2.msra.mxu0 0.0
        %301 = vmatprep.subr.mxu0 0.0
        %302 = vmatpush2.msra.mxu0 0.0
        %303 = vmatprep.subr.mxu0 0.0
        %304 = vmatpush2.msra.mxu0 0.0
        %305 = vmatprep.subr.mxu0 0.0
        %306 = vmatpush2.msra.mxu0 0.0
        %307 = vmatprep.subr.mxu0 0.0
        %308 = vmatpush2.msra.mxu0 0.0
        %309 = vmatprep.subr.mxu0 0.0
        %310 = vmatpush2.msra.mxu0 0.0
        %311 = vmatprep.subr.mxu0 0.0
        %312 = vmatpush2.msra.mxu0 0.0
        %313 = vmatprep.subr.mxu0 0.0
        %314 = vmatpush2.msra.mxu0 0.0
        %315 = vmatprep.subr.mxu0 0.0
        %316 = vmatpush2.msra.mxu0 0.0
        %317 = vmatprep.subr.mxu0 0.0
        %318 = vmatpush2.msra.mxu0 0.0
        %319 = vmatprep.mubr.f32.mxu0 0.0
        %320 = vmatmul.mubr.f32.gmra.mxu0 %v238
        %v321 = vpop.f32.mrf.mxu0
        %v322 = vadd.f32 0.0, %v321
        %v323 = vpop.f32.mrf.mxu0
        %324 = vdwg.mxu0
        %v325 = vld [vmem:[%s237] sm:$0xff]
        %327 = vset.pattern.permute.xlu0 0
        %328 = vperm.xlu0 %327, %v325
        %v329 = vpop.permute.xlu0 %328
        %v331 = vmul.f32 %v322, %v329
        %v332 = vld [vmem:[#allocation5] sm:$0x1]
        %v333 = vld [vmem:[#allocation5 + $0x1] sm:$0x1]
        %v334 = vld [vmem:[#allocation5 + $0x2] sm:$0x1]
        %v335 = vlaneseq
        %v336 = vshrl.u32 %v335, 7
        %v337 = vsub.s32 0, %v336
        %v338 = vrot.slane %v332, %v337
        %v339 = vadd.f32 %v331, %v338
        %340 = vadd.xlane.f32.xlu0 %v339
        %v341 = vpop.xlane.xlu0 %340
        %v342 = vmul.f32 %v341, 0.03125
        %v343 = vmul.f32 %v339, %v339
        %344 = vadd.xlane.f32.xlu0 %v343
        %v345 = vpop.xlane.xlu0 %344
        %v346 = vmul.f32 %v345, 0.03125
        %v347 = vmul.f32 %v342, %v342
        %v348 = vsub.f32 %v346, %v347
        %v349 = vmax.f32 %v348, 0.0
        %v350 = vadd.f32 %v349, 1e-05
        %v351 = vrsqrt.pop %v350
        %v352 = vsub.f32 %v339, %v342
        %v353 = vmul.f32 %v352, %v351
        %v354 = vlaneseq
        %v355 = vshrl.u32 %v354, 7
        %v356 = vsub.s32 0, %v355
        %v357 = vrot.slane %v333, %v356
        %v358 = vmul.f32 %v353, %v357
        %v359 = vlaneseq
        %v360 = vshrl.u32 %v359, 7
        %v361 = vsub.s32 0, %v360
        %v362 = vrot.slane %v334, %v361
        %v363 = vadd.f32 %v358, %v362
        %v364 = vmul.f32 %v363, 0.01
        %v365 = vmax.f32 %v363, %v364
        %366 = vst [vmem:[%s229] sm:$0xff] %v365
        %s367 = sand.u32 %s122, 1
        %s368 = scalar_lea.sflag [#allocation4], %s367
        %s369 = sand.u32 %s122, 1
        %s370 = smul.addr %s369, 8
        %s371 = scalar_lea.vmem [#allocation7], %s370
        // Predicated region
        $region45: #{tpu_custom_call.1} parent=35 // pred_check
          %p372 = pneg %p132
        $region46: #{tpu_custom_call.1} parent=35 // pred_check_branch
          %374 = sbr.rel (%p372) target = $region48
        $region47: #{tpu_custom_call.1} parent=35 // pred_region
          %s376 = ssub.s32 128, 128
          %377 = vsyncadd %s368, %s376
          %s378 = smul.addr %s20, 128
          %s379 = scalar_lea.hbm %s4, %s378
          %s381 = sshll.u32 %s371, 4
          %s382 = int_to_ptr.vmem [resolvable:$true] %s381
          %384 = dma.vmem_to_hbm [thread:$0]  %s382, 128, %s379, %s368
        $region48: #{tpu_custom_call.1} parent=35 // pred_fallthru
          _
      $region36: #{tpu_custom_call.1} parent=5 // pred_fallthru
        _
      %p385 = scmp.le.s32.totalorder 2, %s15
      // Predicated region
      $region49: #{tpu_custom_call.1} parent=5 // pred_check
        %p386 = pneg %p385
      $region50: #{tpu_custom_call.1} parent=5 // pred_check_branch
        %388 = sbr.rel (%p386) target = $region52
      $region51: #{tpu_custom_call.1} parent=5 // pred_region
        %s389 = ssub.s32 %s15, 2
        // Predicated region
        $region53: #{tpu_custom_call.1} parent=51 // pred_check
          %p390 = pneg %p138
        $region54: #{tpu_custom_call.1} parent=51 // pred_check_branch
          %392 = sbr.rel (%p390) target = $region56
        $region55: #{tpu_custom_call.1} parent=51 // pred_region
          %s393 = sand.u32 %s123, 1
          %s394 = scalar_lea.sflag [#allocation4], %s393
          %s395 = sand.u32 %s123, 1
          %s396 = smul.addr %s395, 8
          %s397 = scalar_lea.vmem [#allocation7], %s396
          %398 = dma.done %s394, 128
        $region56: #{tpu_custom_call.1} parent=51 // pred_fallthru
          _
      $region52: #{tpu_custom_call.1} parent=5 // pred_fallthru
        _
    $region6: #{tpu_custom_call.1} parent=1 // loop_footer
      %s19 = sadd.s32 1, %s15
    $region7: #{tpu_custom_call.1} parent=1 // loop_footer_branch
      %14 = sbr.rel target = $region3
    $region8: #{tpu_custom_call.1} parent=1 // loop_exit
      _
    %399 = vsyncpa [#allocation3], 1
    %s400 = scalar_lea.sflag [#allocation3], 1
    %401 = vsyncpa %s400, 1
    %402 = vsyncpa [#allocation6], 1
    %403 = vsyncpa [#allocation4], 1
    %s404 = scalar_lea.sflag [#allocation4], 1
    %405 = vsyncpa %s404, 1

// kernel: tpu_custom_call.1
$region0: #{tpu_custom_call.1}
  #allocation0 [shape = 'u32[]', space=smem, size = 0x4, offset = 0x4, fixed_abs, tag = 'smem constant byte address 0x4 - core index']
  #allocation1 [shape = 'u32[144,128]{1,0:T(1,128)}', space=vmem, size = 0x12000, scoped, tag = 'internal scratch']
  %s0 = inlined_call_operand.vmem [shape: f32[16,128], index: 0, kind: input, shape index: {}]
  %s1 = inlined_call_operand.vmem [shape: f32[16,1], index: 1, kind: input, shape index: {}]
  %s2 = inlined_call_operand.hbm [shape: f32[128,128], index: 2, kind: input, shape index: {}]
  %s3 = inlined_call_operand.hbm [shape: f32[8,128], index: 3, kind: input, shape index: {}]
  %s4 = inlined_call_operand.hbm [shape: f32[16,128], index: 4, kind: output, shape index: {}]
  %s5 = sld [smem:[#allocation0]]
  $region57: #{tpu_custom_call.1} parent=0
    _
  %s7 = ssub.s32 1, %s5
  %s8 = scalar_select 0, %s7, %s5
  $region1: #{tpu_custom_call.1} parent=0
    #allocation2 [shape = 'u8[65536]{0}', space=vmem, size = 0x10000, scoped, tag = 'input window, operand 2, single buffered']
    #allocation3 [shape = 's32[2]{0}', space=sflag, size = 0x8, scoped, tag = 'scoped memory for tpu_custom_call.1']
    #allocation4 [shape = 's32[2]{0}', space=sflag, size = 0x8, scoped, tag = 'scoped memory for tpu_custom_call.1']
    #allocation5 [shape = 'u8[4096]{0}', space=vmem, size = 0x1000, scoped, tag = 'input window, operand 3, single buffered']
    #allocation6 [shape = 's32[1]{0}', space=sflag, size = 0x4, scoped, tag = 'scoped memory for tpu_custom_call.1']
    #allocation7 [shape = 'u8[8192]{0}', space=vmem, size = 0x2000, scoped, tag = 'output window, operand 0']
    %9 = vsyncpa [#allocation3], 0
    %10 = vsyncpa [#allocation6], 0
    %11 = vsyncpa [#allocation4], 0
    %s12 = scalar_lea.sflag [#allocation4], 1
    %13 = vsyncpa %s12, 0
    loop: start=0, step=1, limit=4
    $region2: #{tpu_custom_call.1} parent=1 // loop_pre_header
      _
    $region3: #{tpu_custom_call.1} parent=1 // loop_header
      %s15 = sphi 0, %s19
      %p16 = scmp.ge.s32.totalorder %s15, 4
      %s25 = sphi 0, %s27
      %s28 = sphi 0, %s25
      %s29 = sphi 0, %s28
      %s45 = sphi 0, %s29
      %s51 = sphi 0, %s53
      %s54 = sphi 0, %s51
      %s55 = sphi 0, %s54
      %s71 = sphi 0, %s55
      %s75 = sphi 0, %s75
      %s77 = sphi 0, %s75
      %s78 = sphi 0, %s77
      %s92 = sphi 0, %s78
      %s96 = sphi 0, %s96
      %s98 = sphi 0, %s96
      %s99 = sphi 0, %s98
      %s113 = sphi 0, %s99
      %s119 = sphi 0, %s121
      %s122 = sphi 0, %s119
      %s123 = sphi 0, %s122
      %s139 = sphi 0, %s123
    $region4: #{tpu_custom_call.1} parent=1 // loop_header_branch
      %18 = sbr.rel (%p16) target = $region8
    $region5: #{tpu_custom_call.1} parent=1 // loop_body
      %s20 = ssub.s32 %s15, 1
      %s21 = ssub.s32 %s15, 2
      %s22 = sadd.s32 %s15, 1
      %s23 = ssub.s32 %s15, %s22
      %p24 = scmp.eq.s32.totalorder %s23, 0
      %s26 = sadd.s32 %s25, 1
      %s27 = scalar_select %p24, %s25, %s26
      %p30 = pneg %p24
      %p31 = scmp.eq.s32.totalorder %s15, 1
      %p32 = por %p30, %p31
      %p33 = scmp.ne.s32.totalorder %s25, %s28
      %p34 = scmp.eq.s32.totalorder %s15, 0
      %p35 = por %p33, %p34
      %p36 = scmp.ne.s32.totalorder %s25, %s28
      %p37 = scmp.eq.s32.totalorder %s20, 1
      %p38 = por %p36, %p37
      %p39 = scmp.ne.s32.totalorder %s28, %s29
      %p40 = scmp.eq.s32.totalorder %s20, 0
      %p41 = por %p39, %p40
      %p42 = scmp.ne.s32.totalorder %s28, %s29
      %p43 = scmp.eq.s32.totalorder %s21, 1
      %p44 = por %p42, %p43
      %p46 = scmp.ne.s32.totalorder %s29, %s45
      %p47 = scmp.eq.s32.totalorder %s21, 0
      %p48 = por %p46, %p47
      %s49 = ssub.s32 %s15, %s22
      %p50 = scmp.eq.s32.totalorder %s49, 0
      %s52 = sadd.s32 %s51, 1
      %s53 = scalar_select %p50, %s51, %s52
      %p56 = pneg %p50
      %p57 = scmp.eq.s32.totalorder %s15, 1
      %p58 = por %p56, %p57
      %p59 = scmp.ne.s32.totalorder %s51, %s54
      %p60 = scmp.eq.s32.totalorder %s15, 0
      %p61 = por %p59, %p60
      %p62 = scmp.ne.s32.totalorder %s51, %s54
      %p63 = scmp.eq.s32.totalorder %s20, 1
      %p64 = por %p62, %p63
      %p65 = scmp.ne.s32.totalorder %s54, %s55
      %p66 = scmp.eq.s32.totalorder %s20, 0
      %p67 = por %p65, %p66
      %p68 = scmp.ne.s32.totalorder %s54, %s55
      %p69 = scmp.eq.s32.totalorder %s21, 1
      %p70 = por %p68, %p69
      %p72 = scmp.ne.s32.totalorder %s55, %s71
      %p73 = scmp.eq.s32.totalorder %s21, 0
      %p74 = por %p72, %p73
      %s76 = sadd.s32 %s75, 1
      %p79 = scmp.eq.s32.totalorder %s15, 1
      %p80 = scmp.ne.s32.totalorder %s75, %s77
      %p81 = scmp.eq.s32.totalorder %s15, 0
      %p82 = por %p80, %p81
      %p83 = scmp.ne.s32.totalorder %s75, %s77
      %p84 = scmp.eq.s32.totalorder %s20, 1
      %p85 = por %p83, %p84
      %p86 = scmp.ne.s32.totalorder %s77, %s78
      %p87 = scmp.eq.s32.totalorder %s20, 0
      %p88 = por %p86, %p87
      %p89 = scmp.ne.s32.totalorder %s77, %s78
      %p90 = scmp.eq.s32.totalorder %s21, 1
      %p91 = por %p89, %p90
      %p93 = scmp.ne.s32.totalorder %s78, %s92
      %p94 = scmp.eq.s32.totalorder %s21, 0
      %p95 = por %p93, %p94
      %s97 = sadd.s32 %s96, 1
      %p100 = scmp.eq.s32.totalorder %s15, 1
      %p101 = scmp.ne.s32.totalorder %s96, %s98
      %p102 = scmp.eq.s32.totalorder %s15, 0
      %p103 = por %p101, %p102
      %p104 = scmp.ne.s32.totalorder %s96, %s98
      %p105 = scmp.eq.s32.totalorder %s20, 1
      %p106 = por %p104, %p105
      %p107 = scmp.ne.s32.totalorder %s98, %s99
      %p108 = scmp.eq.s32.totalorder %s20, 0
      %p109 = por %p107, %p108
      %p110 = scmp.ne.s32.totalorder %s98, %s99
      %p111 = scmp.eq.s32.totalorder %s21, 1
      %p112 = por %p110, %p111
      %p114 = scmp.ne.s32.totalorder %s99, %s113
      %p115 = scmp.eq.s32.totalorder %s21, 0
      %p116 = por %p114, %p115
      %s117 = ssub.s32 %s15, %s22
      %p118 = scmp.eq.s32.totalorder %s117, 0
      %s120 = sadd.s32 %s119, 1
      %s121 = scalar_select %p118, %s119, %s120
      %p124 = pneg %p118
      %p125 = scmp.eq.s32.totalorder %s15, 1
      %p126 = por %p124, %p125
      %p127 = scmp.ne.s32.totalorder %s119, %s122
      %p128 = scmp.eq.s32.totalorder %s15, 0
      %p129 = por %p127, %p128
      %p130 = scmp.ne.s32.totalorder %s119, %s122
      %p131 = scmp.eq.s32.totalorder %s20, 1
      %p132 = por %p130, %p131
      %p133 = scmp.ne.s32.totalorder %s122, %s123
      %p134 = scmp.eq.s32.totalorder %s20, 0
      %p135 = por %p133, %p134
      %p136 = scmp.ne.s32.totalorder %s122, %s123
      %p137 = scmp.eq.s32.totalorder %s21, 1
      %p138 = por %p136, %p137
      %p140 = scmp.ne.s32.totalorder %s123, %s139
      %p141 = scmp.eq.s32.totalorder %s21, 0
      %p142 = por %p140, %p141
      %p143 = scmp.le.s32.totalorder 1, %s15
      %p144 = scmp.lt.s32.totalorder %s15, 3
      %p145 = pnand %p143, %p144
      %p146 = pneg %p145
      // Predicated region
      $region9: #{tpu_custom_call.1} parent=5 // pred_check
        _
      $region10: #{tpu_custom_call.1} parent=5 // pred_check_branch
        %148 = sbr.rel (%p145) target = $region12
      $region11: #{tpu_custom_call.1} parent=5 // pred_region
        %s149 = ssub.s32 %s15, 1
        // Predicated region
        $region13: #{tpu_custom_call.1} parent=11 // pred_check
          %p150 = pneg %p88
        $region14: #{tpu_custom_call.1} parent=11 // pred_check_branch
          %152 = sbr.rel (%p150) target = $region16
        $region15: #{tpu_custom_call.1} parent=11 // pred_region
          %s154 = ssub.s32 2048, 2048
          %155 = vsyncadd [#allocation3], %s154
          %s156 = sshll.u32 [#allocation2], 4
          %s157 = int_to_ptr.vmem [resolvable:$true] %s156
          %162 = dma.hbm_to_vmem [thread:$0]  %s2, 2048, %s157, [#allocation3], 128, 128, 8
        $region16: #{tpu_custom_call.1} parent=11 // pred_fallthru
          _
        // Predicated region
        $region17: #{tpu_custom_call.1} parent=11 // pred_check
          %p163 = pneg %p109
        $region18: #{tpu_custom_call.1} parent=11 // pred_check_branch
          %165 = sbr.rel (%p163) target = $region20
        $region19: #{tpu_custom_call.1} parent=11 // pred_region
          %s167 = ssub.s32 128, 128
          %168 = vsyncadd [#allocation6], %s167
          %s170 = sshll.u32 [#allocation5], 4
          %s171 = int_to_ptr.vmem [resolvable:$true] %s170
          %173 = dma.hbm_to_vmem [thread:$0]  %s3, 128, %s171, [#allocation6]
        $region20: #{tpu_custom_call.1} parent=11 // pred_fallthru
          _
      $region12: #{tpu_custom_call.1} parent=5 // pred_fallthru
        _
      %p174 = scmp.lt.s32.totalorder %s15, 2
      // Predicated region
      $region21: #{tpu_custom_call.1} parent=5 // pred_check
        %p175 = pneg %p174
      $region22: #{tpu_custom_call.1} parent=5 // pred_check_branch
        %177 = sbr.rel (%p175) target = $region24
      $region23: #{tpu_custom_call.1} parent=5 // pred_region
        // Predicated region
        $region25: #{tpu_custom_call.1} parent=23 // pred_check
          %p178 = pneg %p35
        $region26: #{tpu_custom_call.1} parent=23 // pred_check_branch
          %180 = sbr.rel (%p178) target = $region28
        $region27: #{tpu_custom_call.1} parent=23 // pred_region
          %p181 = scmp.lt.s32.totalorder %s15, 1
          %s182 = scalar_select %p181, %s15, 1
          %s183 = smul.addr %s182, 8
          %s184 = scalar_lea.vmem %s0, %s183
        $region28: #{tpu_custom_call.1} parent=23 // pred_fallthru
          _
        // Predicated region
        $region29: #{tpu_custom_call.1} parent=23 // pred_check
          %p185 = pneg %p61
        $region30: #{tpu_custom_call.1} parent=23 // pred_check_branch
          %187 = sbr.rel (%p185) target = $region32
        $region31: #{tpu_custom_call.1} parent=23 // pred_region
          %p188 = scmp.lt.s32.totalorder %s15, 1
          %s189 = scalar_select %p188, %s15, 1
          %s190 = smul.addr %s189, 8
          %s191 = scalar_lea.vmem %s1, %s190
        $region32: #{tpu_custom_call.1} parent=23 // pred_fallthru
          _
      $region24: #{tpu_custom_call.1} parent=5 // pred_fallthru
        _
      %p192 = scmp.le.s32.totalorder 1, %s15
      %p193 = scmp.lt.s32.totalorder %s15, 3
      %p194 = pnand %p192, %p193
      %p195 = pneg %p194
      // Predicated region
      $region33: #{tpu_custom_call.1} parent=5 // pred_check
        _
      $region34: #{tpu_custom_call.1} parent=5 // pred_check_branch
        %197 = sbr.rel (%p194) target = $region36
      $region35: #{tpu_custom_call.1} parent=5 // pred_region
        %s198 = ssub.s32 %s15, 1
        // Predicated region
        $region37: #{tpu_custom_call.1} parent=35 // pred_check
          %p199 = pneg %p88
        $region38: #{tpu_custom_call.1} parent=35 // pred_check_branch
          %201 = sbr.rel (%p199) target = $region40
        $region39: #{tpu_custom_call.1} parent=35 // pred_region
          %202 = dma.done [#allocation3], 2048
        $region40: #{tpu_custom_call.1} parent=35 // pred_fallthru
          _
        // Predicated region
        $region41: #{tpu_custom_call.1} parent=35 // pred_check
          %p203 = pneg %p109
        $region42: #{tpu_custom_call.1} parent=35 // pred_check_branch
          %205 = sbr.rel (%p203) target = $region44
        $region43: #{tpu_custom_call.1} parent=35 // pred_region
          %206 = dma.done [#allocation6], 128
        $region44: #{tpu_custom_call.1} parent=35 // pred_fallthru
          _
        %p207 = scmp.lt.s32.totalorder %s20, 1
        %s208 = scalar_select %p207, %s20, 1
        %s209 = smul.addr %s208, 8
        %s210 = scalar_lea.vmem %s0, %s209
        %p211 = pneg %p41
        %p212 = pneg %p38
        %p213 = scmp.lt.s32.totalorder %s20, 1
        %s214 = scalar_select %p213, %s20, 1
        %s215 = smul.addr %s214, 8
        %s216 = scalar_lea.vmem %s1, %s215
        %p217 = pneg %p67
        %p218 = pneg %p64
        %p219 = pneg %p88
        %p220 = pneg %p85
        %p221 = pneg %p109
        %p222 = pneg %p106
        %p223 = pneg %p135
        %p224 = pneg %p132
        %s225 = sand.u32 %s122, 1
        %s226 = scalar_lea.sflag [#allocation4], %s225
        %s227 = sand.u32 %s122, 1
        %s228 = smul.addr %s227, 8
        %s229 = scalar_lea.vmem [#allocation7], %s228
        %p230 = scmp.lt.s32.totalorder %s20, 1
        %s231 = scalar_select %p230, %s20, 1
        %s232 = smul.addr %s231, 8
        %s233 = scalar_lea.vmem %s0, %s232
        %p234 = scmp.lt.s32.totalorder %s20, 1
        %s235 = scalar_select %p234, %s20, 1
        %s236 = smul.addr %s235, 8
        %s237 = scalar_lea.vmem %s1, %s236
        %v238 = vld [vmem:[%s233] sm:$0xff]
        %v239 = vld [vmem:[#allocation2] sm:$0xff]
        %v240 = vld [vmem:[#allocation2 + $0x8] sm:$0xff]
        %v241 = vld [vmem:[#allocation2 + $0x10] sm:$0xff]
        %v242 = vld [vmem:[#allocation2 + $0x18] sm:$0xff]
        %v243 = vld [vmem:[#allocation2 + $0x20] sm:$0xff]
        %v244 = vld [vmem:[#allocation2 + $0x28] sm:$0xff]
        %v245 = vld [vmem:[#allocation2 + $0x30] sm:$0xff]
        %v246 = vld [vmem:[#allocation2 + $0x38] sm:$0xff]
        %v247 = vld [vmem:[#allocation2 + $0x40] sm:$0xff]
        %v248 = vld [vmem:[#allocation2 + $0x48] sm:$0xff]
        %v249 = vld [vmem:[#allocation2 + $0x50] sm:$0xff]
        %v250 = vld [vmem:[#allocation2 + $0x58] sm:$0xff]
        %v251 = vld [vmem:[#allocation2 + $0x60] sm:$0xff]
        %v252 = vld [vmem:[#allocation2 + $0x68] sm:$0xff]
        %v253 = vld [vmem:[#allocation2 + $0x70] sm:$0xff]
        %v254 = vld [vmem:[#allocation2 + $0x78] sm:$0xff]
        %255 = vmatprep.subr.mxu0 0.0
        %256 = vmatpush1.msra.mxu0 %v254
        %257 = vmatprep.subr.mxu0 0.0
        %258 = vmatpush1.msra.mxu0 %v253
        %259 = vmatprep.subr.mxu0 0.0
        %260 = vmatpush1.msra.mxu0 %v252
        %261 = vmatprep.subr.mxu0 0.0
        %262 = vmatpush1.msra.mxu0 %v251
        %263 = vmatprep.subr.mxu0 0.0
        %264 = vmatpush1.msra.mxu0 %v250
        %265 = vmatprep.subr.mxu0 0.0
        %266 = vmatpush1.msra.mxu0 %v249
        %267 = vmatprep.subr.mxu0 0.0
        %268 = vmatpush1.msra.mxu0 %v248
        %269 = vmatprep.subr.mxu0 0.0
        %270 = vmatpush1.msra.mxu0 %v247
        %271 = vmatprep.subr.mxu0 0.0
        %272 = vmatpush1.msra.mxu0 %v246
        %273 = vmatprep.subr.mxu0 0.0
        %274 = vmatpush1.msra.mxu0 %v245
        %275 = vmatprep.subr.mxu0 0.0
        %276 = vmatpush1.msra.mxu0 %v244
        %277 = vmatprep.subr.mxu0 0.0
        %278 = vmatpush1.msra.mxu0 %v243
        %279 = vmatprep.subr.mxu0 0.0
        %280 = vmatpush1.msra.mxu0 %v242
        %281 = vmatprep.subr.mxu0 0.0
        %282 = vmatpush1.msra.mxu0 %v241
        %283 = vmatprep.subr.mxu0 0.0
        %284 = vmatpush1.msra.mxu0 %v240
        %285 = vmatprep.subr.mxu0 0.0
        %286 = vmatpush1.msra.mxu0 %v239
        %287 = vmatprep.subr.mxu0 0.0
        %288 = vmatpush2.msra.mxu0 0.0
        %289 = vmatprep.subr.mxu0 0.0
        %290 = vmatpush2.msra.mxu0 0.0
        %291 = vmatprep.subr.mxu0 0.0
        %292 = vmatpush2.msra.mxu0 0.0
        %293 = vmatprep.subr.mxu0 0.0
        %294 = vmatpush2.msra.mxu0 0.0
        %295 = vmatprep.subr.mxu0 0.0
        %296 = vmatpush2.msra.mxu0 0.0
        %297 = vmatprep.subr.mxu0 0.0
        %298 = vmatpush2.msra.mxu0 0.0
        %299 = vmatprep.subr.mxu0 0.0
        %300 = vmatpush2.msra.mxu0 0.0
        %301 = vmatprep.subr.mxu0 0.0
        %302 = vmatpush2.msra.mxu0 0.0
        %303 = vmatprep.subr.mxu0 0.0
        %304 = vmatpush2.msra.mxu0 0.0
        %305 = vmatprep.subr.mxu0 0.0
        %306 = vmatpush2.msra.mxu0 0.0
        %307 = vmatprep.subr.mxu0 0.0
        %308 = vmatpush2.msra.mxu0 0.0
        %309 = vmatprep.subr.mxu0 0.0
        %310 = vmatpush2.msra.mxu0 0.0
        %311 = vmatprep.subr.mxu0 0.0
        %312 = vmatpush2.msra.mxu0 0.0
        %313 = vmatprep.subr.mxu0 0.0
        %314 = vmatpush2.msra.mxu0 0.0
        %315 = vmatprep.subr.mxu0 0.0
        %316 = vmatpush2.msra.mxu0 0.0
        %317 = vmatprep.subr.mxu0 0.0
        %318 = vmatpush2.msra.mxu0 0.0
        %319 = vmatprep.mubr.f32.mxu0 0.0
        %320 = vmatmul.mubr.f32.gmra.mxu0 %v238
        %v321 = vpop.f32.mrf.mxu0
        %v322 = vadd.f32 0.0, %v321
        %v323 = vpop.f32.mrf.mxu0
        %324 = vdwg.mxu0
        %v325 = vld [vmem:[%s237] sm:$0xff]
        %327 = vset.pattern.permute.xlu0 0
        %328 = vperm.xlu0 %327, %v325
        %v329 = vpop.permute.xlu0 %328
        %v331 = vmul.f32 %v322, %v329
        %v332 = vld [vmem:[#allocation5] sm:$0x1]
        %v333 = vld [vmem:[#allocation5 + $0x1] sm:$0x1]
        %v334 = vld [vmem:[#allocation5 + $0x2] sm:$0x1]
        %v335 = vlaneseq
        %v336 = vshrl.u32 %v335, 7
        %v337 = vsub.s32 0, %v336
        %v338 = vrot.slane %v332, %v337
        %v339 = vadd.f32 %v331, %v338
        %340 = vadd.xlane.f32.xlu0 %v339
        %v341 = vpop.xlane.xlu0 %340
        %v342 = vmul.f32 %v341, 0.03125
        %v343 = vmul.f32 %v339, %v339
        %344 = vadd.xlane.f32.xlu0 %v343
        %v345 = vpop.xlane.xlu0 %344
        %v346 = vmul.f32 %v345, 0.03125
        %v347 = vmul.f32 %v342, %v342
        %v348 = vsub.f32 %v346, %v347
        %v349 = vmax.f32 %v348, 0.0
        %v350 = vadd.f32 %v349, 1e-05
        %v351 = vrsqrt.pop %v350
        %v352 = vsub.f32 %v339, %v342
        %v353 = vmul.f32 %v352, %v351
        %v354 = vlaneseq
        %v355 = vshrl.u32 %v354, 7
        %v356 = vsub.s32 0, %v355
        %v357 = vrot.slane %v333, %v356
        %v358 = vmul.f32 %v353, %v357
        %v359 = vlaneseq
        %v360 = vshrl.u32 %v359, 7
        %v361 = vsub.s32 0, %v360
        %v362 = vrot.slane %v334, %v361
        %v363 = vadd.f32 %v358, %v362
        %v364 = vmul.f32 %v363, 0.01
        %v365 = vmax.f32 %v363, %v364
        %366 = vst [vmem:[%s229] sm:$0xff] %v365
        %s367 = sand.u32 %s122, 1
        %s368 = scalar_lea.sflag [#allocation4], %s367
        %s369 = sand.u32 %s122, 1
        %s370 = smul.addr %s369, 8
        %s371 = scalar_lea.vmem [#allocation7], %s370
        // Predicated region
        $region45: #{tpu_custom_call.1} parent=35 // pred_check
          %p372 = pneg %p132
        $region46: #{tpu_custom_call.1} parent=35 // pred_check_branch
          %374 = sbr.rel (%p372) target = $region48
        $region47: #{tpu_custom_call.1} parent=35 // pred_region
          %s376 = ssub.s32 128, 128
          %377 = vsyncadd %s368, %s376
          %s378 = smul.addr %s20, 128
          %s379 = scalar_lea.hbm %s4, %s378
          %s381 = sshll.u32 %s371, 4
          %s382 = int_to_ptr.vmem [resolvable:$true] %s381
          %384 = dma.vmem_to_hbm [thread:$0]  %s382, 128, %s379, %s368
        $region48: #{tpu_custom_call.1} parent=35 // pred_fallthru
          _
      $region36: #{tpu_custom_call.1} parent=5 // pred_fallthru
        _
      %p385 = scmp.le.s32.totalorder 2, %s15
      // Predicated region
      $region49: #{tpu_custom_call.1} parent=5 // pred_check
        %p386 = pneg %p385
      $region50: #{tpu_custom_call.1} parent=5 // pred_check_branch
        %388 = sbr.rel (%p386) target = $region52
      $region51: #{tpu_custom_call.1} parent=5 // pred_region
        %s389 = ssub.s32 %s15, 2
        // Predicated region
        $region53: #{tpu_custom_call.1} parent=51 // pred_check
          %p390 = pneg %p138
        $region54: #{tpu_custom_call.1} parent=51 // pred_check_branch
          %392 = sbr.rel (%p390) target = $region56
        $region55: #{tpu_custom_call.1} parent=51 // pred_region
          %s393 = sand.u32 %s123, 1
          %s394 = scalar_lea.sflag [#allocation4], %s393
          %s395 = sand.u32 %s123, 1
          %s396 = smul.addr %s395, 8
          %s397 = scalar_lea.vmem [#allocation7], %s396
          %398 = dma.done %s394, 128
        $region56: #{tpu_custom_call.1} parent=51 // pred_fallthru
          _
      $region52: #{tpu_custom_call.1} parent=5 // pred_fallthru
        _
    $region6: #{tpu_custom_call.1} parent=1 // loop_footer
      %s19 = sadd.s32 1, %s15
    $region7: #{tpu_custom_call.1} parent=1 // loop_footer_branch
      %14 = sbr.rel target = $region3
    $region8: #{tpu_custom_call.1} parent=1 // loop_exit
      _
    %399 = vsyncpa [#allocation3], 1
    %s400 = scalar_lea.sflag [#allocation3], 1
    %401 = vsyncpa %s400, 1
    %402 = vsyncpa [#allocation6], 1
    %403 = vsyncpa [#allocation4], 1
    %s404 = scalar_lea.sflag [#allocation4], 1
    %405 = vsyncpa %s404, 1

</llo_original>
